<compile_context>
chip_gen: v6e
topology: v6e:2x2x1
jax: 0.10.0
libtpu: 0.0.40
codegen_flags: <defaults>
</compile_context>

<pallas_src>
import jax
import jax.numpy as jnp
from jax.experimental import pallas as pl
from jax.experimental.pallas import tpu as pltpu


def _round_up(v, m):
    return ((v + m - 1) // m) * m


def _pick_tile(dim, max_tile):
    """Largest 128-multiple tile <= max_tile that minimizes padding of `dim`."""
    max_tile = max(128, _round_up(max_tile, 128) if max_tile % 128 else max_tile)
    dim128 = _round_up(max(dim, 1), 128)
    if dim128 <= max_tile:
        return dim128
    best_t, best_pad = 128, None
    for t in range(max_tile, 127, -128):
        pad = _round_up(dim128, t)
        if best_pad is None or pad < best_pad:
            best_t, best_pad = t, pad
    return best_t


def _vmem_cap_bytes():
    """Generation-aware scoped-VMEM cap (leave headroom under physical VMEM)."""
    try:
        phys = int(getattr(pltpu.get_tpu_info(), "vmem_capacity_bytes"))
    except Exception:
        phys = 128 << 20
    if phys >= (128 << 20):      # v5e / v6e: 128 MiB physical
        return 64 << 20
    return 48 << 20              # v7x: 64 MiB physical — keep margin


def _linear_relu_kernel(x_ref, w_ref, b_ref, o_ref, acc_ref):
    """One (tile_b, tile_n) output tile, accumulating over the K grid axis."""
    k = pl.program_id(2)

    # Fold the bias into the accumulator init (saves a full-tile VPU add in
    # the epilogue).
    @pl.when(k == 0)
    def _():
        acc_ref[...] = jnp.broadcast_to(b_ref[...], acc_ref.shape)

    # bf16 x bf16 -> f32 accumulate on the MXU.
    acc_ref[...] += jnp.dot(
        x_ref[...], w_ref[...], preferred_element_type=jnp.float32
    )

    @pl.when(k == pl.num_programs(2) - 1)
    def _():
        o_ref[...] = jnp.maximum(acc_ref[...], 0.0).astype(o_ref.dtype)


def prepare_dense_weenet_params(
    w_t,
    b,
    *,
    max_tile_n=512,
    max_tile_k=2048,
    compute_dtype=jnp.bfloat16,
):
    """One-time (static) weight/bias preparation: cast to bf16 and zero-pad
    to tile multiples so the per-forward hot path never touches W again.

    w_t : [D_in, D_out]  (transpose of the PyTorch nn.Linear weight)
    b   : [D_out]
    """
    D_in, D_out = w_t.shape
    tile_n = _pick_tile(D_out, max_tile_n)
    tile_k = _pick_tile(D_in, max_tile_k)
    K_p = _round_up(D_in, tile_k)
    N_p = _round_up(D_out, tile_n)

    w_c = w_t.astype(compute_dtype)
    if (K_p, N_p) != (D_in, D_out):
        w_c = jnp.zeros((K_p, N_p), compute_dtype).at[:D_in, :D_out].set(w_c)
    b_p = jnp.zeros((1, N_p), jnp.float32).at[0, :D_out].set(b.astype(jnp.float32))

    return dict(
        w_p=w_c, b_p=b_p,
        D_in=D_in, D_out=D_out,
        tile_k=tile_k, tile_n=tile_n,
        compute_dtype=compute_dtype,
    )


def dense_weenet_forward(x, params, *, max_tile_b=512, out_dtype=None):
    """F.relu(x @ W^T + b) with the hot path inside a Pallas TPU kernel.

    x      : [B, D_in]
    params : output of prepare_dense_weenet_params (padded bf16 W^T, f32 bias)
    Returns [B, D_out] in out_dtype (default: x.dtype). Pass
    out_dtype=jnp.bfloat16 to halve the output writeback if the consumer
    tolerates it.
    """
    w_p, b_p = params["w_p"], params["b_p"]
    D_in, D_out = params["D_in"], params["D_out"]
    tile_k, tile_n = params["tile_k"], params["tile_n"]
    compute_dtype = params["compute_dtype"]
    K_p, N_p = w_p.shape

    B, D_in_x = x.shape
    assert D_in_x == D_in, "weight / input feature mismatch"
    out_dtype = x.dtype if out_dtype is None else out_dtype

    # Pick a batch tile that is a 128-multiple and minimizes padding waste.
    tile_b = _pick_tile(B, max_tile_b)
    B_p = _round_up(B, tile_b)
    grid_b, grid_n = B_p // tile_b, N_p // tile_n

    # Megacore (v7x): keep >= 2 blocks on the parallel axes when we can do so
    # without breaking 128-alignment (halving only when tile_b % 256 == 0).
    if grid_b * grid_n < 2 and tile_b >= 256 and tile_b % 256 == 0:
        tile_b //= 2
        grid_b = B_p // tile_b

    grid_k = K_p // tile_k
    grid = (grid_b, grid_n, grid_k)

    # Pad/cast x only when actually needed (zero padding is exact for matmul;
    # padded rows evaluate to ReLU(b) and are sliced off below).
    x_c = x.astype(compute_dtype)
    if (B_p, K_p) != (B, D_in):
        x_c = jnp.zeros((B_p, K_p), compute_dtype).at[:B, :D_in].set(x_c)

    in_sz = jnp.dtype(compute_dtype).itemsize
    out_sz = jnp.dtype(out_dtype).itemsize

    # VMEM budget: double-buffered tiles + f32 accumulator, with headroom,
    # capped per-generation.
    vmem_need = (
        2 * tile_b * tile_k * in_sz        # x tile
        + 2 * tile_k * tile_n * in_sz      # weight tile
        + 2 * 1 * tile_n * 4               # bias tile
        + 2 * tile_b * tile_n * out_sz     # output tile
        + tile_b * tile_n * 4              # accumulator scratch
    )
    vmem_limit = int(min(vmem_need + (8 << 20), _vmem_cap_bytes()))

    # Advisory cost: reflect the actual streamed HBM traffic (x re-read once
    # per N tile, W re-read once per B tile).
    cost = pl.CostEstimate(
        flops=2 * B_p * K_p * N_p,
        transcendentals=0,
        bytes_accessed=(
            B_p * K_p * in_sz * grid_n
            + K_p * N_p * in_sz * grid_b
            + N_p * 4 * grid_b
            + B_p * N_p * out_sz
        ),
    )

    out_p = pl.pallas_call(
        _linear_relu_kernel,
        out_shape=jax.ShapeDtypeStruct((B_p, N_p), out_dtype),
        grid_spec=pltpu.PrefetchScalarGridSpec(
            num_scalar_prefetch=0,
            grid=grid,
            in_specs=[
                pl.BlockSpec((tile_b, tile_k), lambda i, j, k: (i, k)),  # x tile
                pl.BlockSpec((tile_k, tile_n), lambda i, j, k: (k, j)),  # W^T tile
                pl.BlockSpec((1, tile_n), lambda i, j, k: (0, j)),       # bias tile
            ],
            out_specs=pl.BlockSpec((tile_b, tile_n), lambda i, j, k: (i, j)),
            scratch_shapes=[pltpu.VMEM((tile_b, tile_n), jnp.float32)],
        ),
        compiler_params=pltpu.CompilerParams(
            dimension_semantics=("parallel", "parallel", "arbitrary"),
            vmem_limit_bytes=vmem_limit,
        ),
        cost_estimate=cost,
    )(x_c, w_p, b_p)

    if (B_p, N_p) != (B, D_out):
        out_p = out_p[:B, :D_out]
    return out_p


if __name__ == "__main__":
    # Small shapes consistent with nn.Linear(D_in, D_out): batch=8, D_in=32,
    # D_out=16.  (At this size the kernel is overhead-dominated; the tiling
    # logic is shaped for production 128+ aligned sizes — this is a
    # correctness demo.)
    B, D_in, D_out = 8, 32, 16

    key = jax.random.PRNGKey(0)
    kx, kw, kb = jax.random.split(key, 3)

    # Deterministic init mimicking PyTorch Linear default
    # (uniform in [-1/sqrt(D_in), 1/sqrt(D_in)]).
    bound = 1.0 / (D_in ** 0.5)
    w = jax.random.uniform(kw, (D_out, D_in), jnp.float32, -bound, bound)  # torch layout
    b = jax.random.uniform(kb, (D_out,), jnp.float32, -bound, bound)
    x = jax.random.normal(kx, (B, D_in), jnp.float32)

    # One-time weight preparation (hoisted out of the per-forward hot path).
    params = prepare_dense_weenet_params(w.T, b)

    out = dense_weenet_forward(x, params)
    out = jax.block_until_ready(out)

    # Reference with matching numerics: bf16 inputs, f32 accumulate, f32 bias+ReLU.
    x_r = x.astype(jnp.bfloat16).astype(jnp.float32)
    w_r = w.T.astype(jnp.bfloat16).astype(jnp.float32)
    ref = jnp.maximum(x_r @ w_r + b, 0.0)

    assert out.shape == (B, D_out)
    assert out.dtype == x.dtype
    assert jnp.allclose(out, ref, atol=1e-4, rtol=1e-4), "mismatch vs reference"

    print("KERNEL_OK")
</pallas_src>

<mosaic_0001>
module attributes {stable_mosaic.version = 11 : i64} {
  func.func @_linear_relu_kernel(%arg0: i32, %arg1: i32, %arg2: i32, %arg3: memref<128x128xbf16, #tpu.memory_space<vmem>>, %arg4: memref<128x128xbf16, #tpu.memory_space<vmem>>, %arg5: memref<1x128xf32, #tpu.memory_space<vmem>>, %arg6: memref<128x128xf32, #tpu.memory_space<vmem>>, %arg7: memref<128x128xf32, #tpu.memory_space<vmem>>) attributes {dimension_semantics = [#tpu.dimension_semantics<parallel>, #tpu.dimension_semantics<parallel>, #tpu.dimension_semantics<arbitrary>], iteration_bounds = array<i64: 1, 1, 1>, scalar_prefetch = 0 : i64, scratch_operands = 1 : i64, tpu.core_type = #tpu.core_type<tc>, window_params = [{transform_indices = @transform_0, window_bounds = array<i64: 128, 128>}, {transform_indices = @transform_1, window_bounds = array<i64: 128, 128>}, {transform_indices = @transform_2, window_bounds = array<i64: 1, 128>}, {transform_indices = @transform_3, window_bounds = array<i64: 128, 128>}]} {
    %c0_i32 = arith.constant 0 : i32
    %0 = arith.cmpi eq, %arg2, %c0_i32 : i32
    %1 = arith.extui %0 : i1 to i32
    %c0_i32_0 = arith.constant 0 : i32
    %2 = arith.cmpi ne, %1, %c0_i32_0 : i32
    scf.if %2 {
      %c0_10 = arith.constant 0 : index
      %c0_11 = arith.constant 0 : index
      %12 = vector.load %arg5[%c0_10, %c0_11] : memref<1x128xf32, #tpu.memory_space<vmem>>, vector<1x128xf32>
      %13 = vector.shape_cast %12 : vector<1x128xf32> to vector<1x128xf32>
      %14 = vector.broadcast %13 : vector<1x128xf32> to vector<128x128xf32>
      %c0_12 = arith.constant 0 : index
      %c0_13 = arith.constant 0 : index
      %15 = vector.load %arg7[%c0_12, %c0_13] : memref<128x128xf32, #tpu.memory_space<vmem>>, vector<128x128xf32>
      tpu.vector_store %arg7[%c0_12, %c0_13], %14 {strides = array<i32>} : memref<128x128xf32, #tpu.memory_space<vmem>>, vector<128x128xf32>,
    } else {
    }
    %c0 = arith.constant 0 : index
    %c0_1 = arith.constant 0 : index
    %3 = vector.load %arg7[%c0, %c0_1] : memref<128x128xf32, #tpu.memory_space<vmem>>, vector<128x128xf32>
    %c0_2 = arith.constant 0 : index
    %c0_3 = arith.constant 0 : index
    %4 = vector.load %arg3[%c0_2, %c0_3] : memref<128x128xbf16, #tpu.memory_space<vmem>>, vector<128x128xbf16>
    %c0_4 = arith.constant 0 : index
    %c0_5 = arith.constant 0 : index
    %5 = vector.load %arg4[%c0_4, %c0_5] : memref<128x128xbf16, #tpu.memory_space<vmem>>, vector<128x128xbf16>
    %cst = arith.constant dense<0.000000e+00> : vector<128x128xf32>
    %6 = tpu.matmul %4, %5, %cst {dimension_numbers = #tpu.dot_dimension_numbers<[1], [0], [0], [1], [0, 0, 1, 1], [], []>} : vector<128x128xbf16>, vector<128x128xbf16>, vector<128x128xf32> -> vector<128x128xf32>
    %7 = arith.addf %3, %6 : vector<128x128xf32>
    %c0_6 = arith.constant 0 : index
    %c0_7 = arith.constant 0 : index
    %8 = vector.load %arg7[%c0_6, %c0_7] : memref<128x128xf32, #tpu.memory_space<vmem>>, vector<128x128xf32>
    tpu.vector_store %arg7[%c0_6, %c0_7], %7 {strides = array<i32>} : memref<128x128xf32, #tpu.memory_space<vmem>>, vector<128x128xf32>,
    %c0_i32_8 = arith.constant 0 : i32
    %9 = arith.cmpi eq, %arg2, %c0_i32_8 : i32
    %10 = arith.extui %9 : i1 to i32
    %c0_i32_9 = arith.constant 0 : i32
    %11 = arith.cmpi ne, %10, %c0_i32_9 : i32
    scf.if %11 {
      %c0_10 = arith.constant 0 : index
      %c0_11 = arith.constant 0 : index
      %12 = vector.load %arg7[%c0_10, %c0_11] : memref<128x128xf32, #tpu.memory_space<vmem>>, vector<128x128xf32>
      %cst_12 = arith.constant 0.000000e+00 : f32
      %13 = vector.broadcast %cst_12 : f32 to vector<128x128xf32>
      %14 = arith.maximumf %12, %13 : vector<128x128xf32>
      %c0_13 = arith.constant 0 : index
      %c0_14 = arith.constant 0 : index
      %15 = vector.load %arg6[%c0_13, %c0_14] : memref<128x128xf32, #tpu.memory_space<vmem>>, vector<128x128xf32>
      tpu.vector_store %arg6[%c0_13, %c0_14], %14 {strides = array<i32>} : memref<128x128xf32, #tpu.memory_space<vmem>>, vector<128x128xf32>,
    } else {
    }
    return
  }
  func.func @transform_0(%arg0: i32, %arg1: i32, %arg2: i32) -> (i32, i32) {
    %c0_i32 = arith.constant 0 : i32
    return %arg0, %arg2 : i32, i32
  }
  func.func @transform_1(%arg0: i32, %arg1: i32, %arg2: i32) -> (i32, i32) {
    %c0_i32 = arith.constant 0 : i32
    return %arg2, %arg1 : i32, i32
  }
  func.func @transform_2(%arg0: i32, %arg1: i32, %arg2: i32) -> (i32, i32) {
    %c0_i32 = arith.constant 0 : i32
    %c0_i32_0 = arith.constant 0 : i32
    return %c0_i32, %arg1 : i32, i32
  }
  func.func @transform_3(%arg0: i32, %arg1: i32, %arg2: i32) -> (i32, i32) {
    %c0_i32 = arith.constant 0 : i32
    return %arg0, %arg1 : i32, i32
  }
}

</mosaic_0001>

<llo_original>
// kernel: tpu_custom_call.1
$region0: #{tpu_custom_call.1}
  #allocation0 [shape = 'u32[]', space=smem, size = 0x4, offset = 0x4, fixed_abs, tag = 'smem constant byte address 0x4 - core index']
  #allocation1 [shape = 'u32[144,128]{1,0:T(1,128)}', space=vmem, size = 0x12000, scoped, tag = 'internal scratch']
  #allocation2 [shape = 'f32[128,128]{1,0:T(8,128)}', space=vmem, size = 0x10000, scoped, tag = 'scratch operand']
  %s0 = inlined_call_operand.hbm [shape: bf16[128,128], index: 0, kind: input, shape index: {}]
  %s1 = inlined_call_operand.hbm [shape: bf16[128,128], index: 1, kind: input, shape index: {}]
  %s2 = inlined_call_operand.vmem [shape: f32[1,128], index: 2, kind: input, shape index: {}]
  %s3 = inlined_call_operand.hbm [shape: f32[128,128], index: 3, kind: output, shape index: {}]
  %s4 = sld [smem:[#allocation0]]
  $region38: #{tpu_custom_call.1} parent=0
    _
  %s6 = ssub.s32 1, %s4
  %s7 = scalar_select 0, %s6, %s4
  $region1: #{tpu_custom_call.1} parent=0
    #allocation3 [shape = 'u8[32768]{0}', space=vmem, size = 0x8000, scoped, tag = 'input window, operand 0, single buffered']
    #allocation4 [shape = 's32[1]{0}', space=sflag, size = 0x4, scoped, tag = 'scoped memory for tpu_custom_call.1']
    #allocation5 [shape = 's32[1]{0}', space=sflag, size = 0x4, scoped, tag = 'scoped memory for tpu_custom_call.1']
    #allocation6 [shape = 'u8[32768]{0}', space=vmem, size = 0x8000, scoped, tag = 'input window, operand 1, single buffered']
    #allocation7 [shape = 's32[1]{0}', space=sflag, size = 0x4, scoped, tag = 'scoped memory for tpu_custom_call.1']
    #allocation8 [shape = 'u8[65536]{0}', space=vmem, size = 0x10000, scoped, tag = 'output window, operand 0, single buffered']
    %8 = vsyncpa [#allocation4], 0
    %9 = vsyncpa [#allocation7], 0
    %10 = vsyncpa [#allocation5], 0
    // Predicated region
    $region2: #{tpu_custom_call.1} parent=1 // pred_check
      _
    $region3: #{tpu_custom_call.1} parent=1 // pred_check_branch
      %12 = sbr.rel (0) target = $region5
    $region4: #{tpu_custom_call.1} parent=1 // pred_region
      %s14 = ssub.s32 1024, 1024
      %15 = vsyncadd [#allocation4], %s14
      %s16 = sshll.u32 [#allocation3], 4
      %s17 = int_to_ptr.vmem [resolvable:$true] %s16
      %22 = dma.hbm_to_vmem [thread:$0]  %s0, 1024, %s17, [#allocation4], 64, 64, 4
    $region5: #{tpu_custom_call.1} parent=1 // pred_fallthru
      _
    // Predicated region
    $region6: #{tpu_custom_call.1} parent=1 // pred_check
      _
    $region7: #{tpu_custom_call.1} parent=1 // pred_check_branch
      %24 = sbr.rel (0) target = $region9
    $region8: #{tpu_custom_call.1} parent=1 // pred_region
      %s26 = ssub.s32 1024, 1024
      %27 = vsyncadd [#allocation7], %s26
      %s28 = sshll.u32 [#allocation6], 4
      %s29 = int_to_ptr.vmem [resolvable:$true] %s28
      %34 = dma.hbm_to_vmem [thread:$0]  %s1, 1024, %s29, [#allocation7], 64, 64, 4
    $region9: #{tpu_custom_call.1} parent=1 // pred_fallthru
      _
    // Predicated region
    $region10: #{tpu_custom_call.1} parent=1 // pred_check
      _
    $region11: #{tpu_custom_call.1} parent=1 // pred_check_branch
      %36 = sbr.rel (0) target = $region13
    $region12: #{tpu_custom_call.1} parent=1 // pred_region
      _
    $region13: #{tpu_custom_call.1} parent=1 // pred_fallthru
      _
    // Predicated region
    $region14: #{tpu_custom_call.1} parent=1 // pred_check
      _
    $region15: #{tpu_custom_call.1} parent=1 // pred_check_branch
      %38 = sbr.rel (0) target = $region17
    $region16: #{tpu_custom_call.1} parent=1 // pred_region
      %39 = dma.done [#allocation4], 1024
    $region17: #{tpu_custom_call.1} parent=1 // pred_fallthru
      _
    // Predicated region
    $region18: #{tpu_custom_call.1} parent=1 // pred_check
      _
    $region19: #{tpu_custom_call.1} parent=1 // pred_check_branch
      %41 = sbr.rel (0) target = $region21
    $region20: #{tpu_custom_call.1} parent=1 // pred_region
      %42 = dma.done [#allocation7], 1024
    $region21: #{tpu_custom_call.1} parent=1 // pred_fallthru
      _
    %p44 = scmp.eq.s32.totalorder 0, 0
    // Predicated region
    $region22: #{tpu_custom_call.1} parent=1 // pred_check
      %p45 = pneg %p44
    $region23: #{tpu_custom_call.1} parent=1 // pred_check_branch
      %47 = sbr.rel (%p45) target = $region25
    $region24: #{tpu_custom_call.1} parent=1 // pred_region
      %v48 = vld [vmem:[%s2] sm:$0x1]
      %v50 = vlaneseq
      %v51 = vshrl.u32 %v50, 7
      %v52 = vsub.s32 0, %v51
      %v53 = vrot.slane %v48, %v52
      %55 = vst [vmem:[#allocation2] sm:$0xff] %v53
      %56 = vst [vmem:[#allocation2 + $0x8] sm:$0xff] %v53
      %57 = vst [vmem:[#allocation2 + $0x10] sm:$0xff] %v53
      %58 = vst [vmem:[#allocation2 + $0x18] sm:$0xff] %v53
      %59 = vst [vmem:[#allocation2 + $0x20] sm:$0xff] %v53
      %60 = vst [vmem:[#allocation2 + $0x28] sm:$0xff] %v53
      %61 = vst [vmem:[#allocation2 + $0x30] sm:$0xff] %v53
      %62 = vst [vmem:[#allocation2 + $0x38] sm:$0xff] %v53
      %63 = vst [vmem:[#allocation2 + $0x40] sm:$0xff] %v53
      %64 = vst [vmem:[#allocation2 + $0x48] sm:$0xff] %v53
      %65 = vst [vmem:[#allocation2 + $0x50] sm:$0xff] %v53
      %66 = vst [vmem:[#allocation2 + $0x58] sm:$0xff] %v53
      %67 = vst [vmem:[#allocation2 + $0x60] sm:$0xff] %v53
      %68 = vst [vmem:[#allocation2 + $0x68] sm:$0xff] %v53
      %69 = vst [vmem:[#allocation2 + $0x70] sm:$0xff] %v53
      %70 = vst [vmem:[#allocation2 + $0x78] sm:$0xff] %v53
    $region25: #{tpu_custom_call.1} parent=1 // pred_fallthru
      _
    %v71 = vld [vmem:[#allocation2] sm:$0xff]
    %v72 = vld [vmem:[#allocation2 + $0x8] sm:$0xff]
    %v73 = vld [vmem:[#allocation2 + $0x10] sm:$0xff]
    %v74 = vld [vmem:[#allocation2 + $0x18] sm:$0xff]
    %v75 = vld [vmem:[#allocation2 + $0x20] sm:$0xff]
    %v76 = vld [vmem:[#allocation2 + $0x28] sm:$0xff]
    %v77 = vld [vmem:[#allocation2 + $0x30] sm:$0xff]
    %v78 = vld [vmem:[#allocation2 + $0x38] sm:$0xff]
    %v79 = vld [vmem:[#allocation2 + $0x40] sm:$0xff]
    %v80 = vld [vmem:[#allocation2 + $0x48] sm:$0xff]
    %v81 = vld [vmem:[#allocation2 + $0x50] sm:$0xff]
    %v82 = vld [vmem:[#allocation2 + $0x58] sm:$0xff]
    %v83 = vld [vmem:[#allocation2 + $0x60] sm:$0xff]
    %v84 = vld [vmem:[#allocation2 + $0x68] sm:$0xff]
    %v85 = vld [vmem:[#allocation2 + $0x70] sm:$0xff]
    %v86 = vld [vmem:[#allocation2 + $0x78] sm:$0xff]
    %v87 = vld [vmem:[#allocation3] sm:$0xf]
    %v88 = vld [vmem:[#allocation3 + $0x4] sm:$0xf]
    %v89 = vld [vmem:[#allocation3 + $0x8] sm:$0xf]
    %v90 = vld [vmem:[#allocation3 + $0xc] sm:$0xf]
    %v91 = vld [vmem:[#allocation3 + $0x10] sm:$0xf]
    %v92 = vld [vmem:[#allocation3 + $0x14] sm:$0xf]
    %v93 = vld [vmem:[#allocation3 + $0x18] sm:$0xf]
    %v94 = vld [vmem:[#allocation3 + $0x1c] sm:$0xf]
    %v95 = vld [vmem:[#allocation3 + $0x20] sm:$0xf]
    %v96 = vld [vmem:[#allocation3 + $0x24] sm:$0xf]
    %v97 = vld [vmem:[#allocation3 + $0x28] sm:$0xf]
    %v98 = vld [vmem:[#allocation3 + $0x2c] sm:$0xf]
    %v99 = vld [vmem:[#allocation3 + $0x30] sm:$0xf]
    %v100 = vld [vmem:[#allocation3 + $0x34] sm:$0xf]
    %v101 = vld [vmem:[#allocation3 + $0x38] sm:$0xf]
    %v102 = vld [vmem:[#allocation3 + $0x3c] sm:$0xf]
    %v103 = vld [vmem:[#allocation6] sm:$0xf]
    %v104 = vld [vmem:[#allocation6 + $0x4] sm:$0xf]
    %v105 = vld [vmem:[#allocation6 + $0x8] sm:$0xf]
    %v106 = vld [vmem:[#allocation6 + $0xc] sm:$0xf]
    %v107 = vld [vmem:[#allocation6 + $0x10] sm:$0xf]
    %v108 = vld [vmem:[#allocation6 + $0x14] sm:$0xf]
    %v109 = vld [vmem:[#allocation6 + $0x18] sm:$0xf]
    %v110 = vld [vmem:[#allocation6 + $0x1c] sm:$0xf]
    %v111 = vld [vmem:[#allocation6 + $0x20] sm:$0xf]
    %v112 = vld [vmem:[#allocation6 + $0x24] sm:$0xf]
    %v113 = vld [vmem:[#allocation6 + $0x28] sm:$0xf]
    %v114 = vld [vmem:[#allocation6 + $0x2c] sm:$0xf]
    %v115 = vld [vmem:[#allocation6 + $0x30] sm:$0xf]
    %v116 = vld [vmem:[#allocation6 + $0x34] sm:$0xf]
    %v117 = vld [vmem:[#allocation6 + $0x38] sm:$0xf]
    %v118 = vld [vmem:[#allocation6 + $0x3c] sm:$0xf]
    %v135 = vunpack.c.l.b16 %v87
    %v136 = vunpack.c.l.b16 %v88
    %v137 = vunpack.c.l.b16 %v89
    %v138 = vunpack.c.l.b16 %v90
    %v139 = vunpack.c.l.b16 %v91
    %v140 = vunpack.c.l.b16 %v92
    %v141 = vunpack.c.l.b16 %v93
    %v142 = vunpack.c.l.b16 %v94
    %v143 = vunpack.c.l.b16 %v95
    %v144 = vunpack.c.l.b16 %v96
    %v145 = vunpack.c.l.b16 %v97
    %v146 = vunpack.c.l.b16 %v98
    %v147 = vunpack.c.l.b16 %v99
    %v148 = vunpack.c.l.b16 %v100
    %v149 = vunpack.c.l.b16 %v101
    %v150 = vunpack.c.l.b16 %v102
    %v151 = vpack.c.b16 %v136, %v135
    %v152 = vpack.c.b16 %v138, %v137
    %v153 = vpack.c.b16 %v140, %v139
    %v154 = vpack.c.b16 %v142, %v141
    %v155 = vpack.c.b16 %v144, %v143
    %v156 = vpack.c.b16 %v146, %v145
    %v157 = vpack.c.b16 %v148, %v147
    %v158 = vpack.c.b16 %v150, %v149
    %v183 = vunpack.c.l.b16 %v103
    %v184 = vunpack.c.l.b16 %v104
    %v185 = vunpack.c.l.b16 %v105
    %v186 = vunpack.c.l.b16 %v106
    %v187 = vunpack.c.l.b16 %v107
    %v188 = vunpack.c.l.b16 %v108
    %v189 = vunpack.c.l.b16 %v109
    %v190 = vunpack.c.l.b16 %v110
    %v191 = vunpack.c.l.b16 %v111
    %v192 = vunpack.c.l.b16 %v112
    %v193 = vunpack.c.l.b16 %v113
    %v194 = vunpack.c.l.b16 %v114
    %v195 = vunpack.c.l.b16 %v115
    %v196 = vunpack.c.l.b16 %v116
    %v197 = vunpack.c.l.b16 %v117
    %v198 = vunpack.c.l.b16 %v118
    %v199 = vpack.c.b16 %v184, %v183
    %v200 = vpack.c.b16 %v186, %v185
    %v201 = vpack.c.b16 %v188, %v187
    %v202 = vpack.c.b16 %v190, %v189
    %v203 = vpack.c.b16 %v192, %v191
    %v204 = vpack.c.b16 %v194, %v193
    %v205 = vpack.c.b16 %v196, %v195
    %v206 = vpack.c.b16 %v198, %v197
    %215 = vmatprep.subr.bf16.mxu0 0
    %216 = vmatpush1.bf16.msra.mxu0 %v206
    %217 = vmatprep.subr.bf16.mxu0 0
    %218 = vmatpush1.bf16.msra.mxu0 %v205
    %219 = vmatprep.subr.bf16.mxu0 0
    %220 = vmatpush1.bf16.msra.mxu0 %v204
    %221 = vmatprep.subr.bf16.mxu0 0
    %222 = vmatpush1.bf16.msra.mxu0 %v203
    %223 = vmatprep.subr.bf16.mxu0 0
    %224 = vmatpush1.bf16.msra.mxu0 %v202
    %225 = vmatprep.subr.bf16.mxu0 0
    %226 = vmatpush1.bf16.msra.mxu0 %v201
    %227 = vmatprep.subr.bf16.mxu0 0
    %228 = vmatpush1.bf16.msra.mxu0 %v200
    %229 = vmatprep.subr.bf16.mxu0 0
    %230 = vmatpush1.bf16.msra.mxu0 %v199
    %231 = vmatprep.subr.bf16.mxu0 0
    %232 = vmatpush2.bf16.msra.mxu0 0
    %233 = vmatprep.subr.bf16.mxu0 0
    %234 = vmatpush2.bf16.msra.mxu0 0
    %235 = vmatprep.subr.bf16.mxu0 0
    %236 = vmatpush2.bf16.msra.mxu0 0
    %237 = vmatprep.subr.bf16.mxu0 0
    %238 = vmatpush2.bf16.msra.mxu0 0
    %239 = vmatprep.subr.bf16.mxu0 0
    %240 = vmatpush2.bf16.msra.mxu0 0
    %241 = vmatprep.subr.bf16.mxu0 0
    %242 = vmatpush2.bf16.msra.mxu0 0
    %243 = vmatprep.subr.bf16.mxu0 0
    %244 = vmatpush2.bf16.msra.mxu0 0
    %245 = vmatprep.subr.bf16.mxu0 0
    %246 = vmatpush2.bf16.msra.mxu0 0
    %247 = vmatprep.mubr.bf16.mxu0 0
    %248 = vmatmul.mubr.bf16.gmra.mxu0 %v151
    %v249 = vpop.f32.mrf.mxu0
    %v250 = vadd.f32 0.0, %v249
    %v251 = vpop.f32.mrf.mxu0
    %v252 = vpop.f32.mrf.mxu0
    %v253 = vadd.f32 0.0, %v252
    %v254 = vpop.f32.mrf.mxu0
    %255 = vmatprep.mubr.bf16.mxu0 0
    %256 = vmatmul.mubr.bf16.gmra.mxu0 %v152
    %v257 = vpop.f32.mrf.mxu0
    %v258 = vadd.f32 0.0, %v257
    %v259 = vpop.f32.mrf.mxu0
    %v260 = vpop.f32.mrf.mxu0
    %v261 = vadd.f32 0.0, %v260
    %v262 = vpop.f32.mrf.mxu0
    %263 = vmatprep.mubr.bf16.mxu0 0
    %264 = vmatmul.mubr.bf16.gmra.mxu0 %v153
    %v265 = vpop.f32.mrf.mxu0
    %v266 = vadd.f32 0.0, %v265
    %v267 = vpop.f32.mrf.mxu0
    %v268 = vpop.f32.mrf.mxu0
    %v269 = vadd.f32 0.0, %v268
    %v270 = vpop.f32.mrf.mxu0
    %271 = vmatprep.mubr.bf16.mxu0 0
    %272 = vmatmul.mubr.bf16.gmra.mxu0 %v154
    %v273 = vpop.f32.mrf.mxu0
    %v274 = vadd.f32 0.0, %v273
    %v275 = vpop.f32.mrf.mxu0
    %v276 = vpop.f32.mrf.mxu0
    %v277 = vadd.f32 0.0, %v276
    %v278 = vpop.f32.mrf.mxu0
    %279 = vmatprep.mubr.bf16.mxu0 0
    %280 = vmatmul.mubr.bf16.gmra.mxu0 %v155
    %v281 = vpop.f32.mrf.mxu0
    %v282 = vadd.f32 0.0, %v281
    %v283 = vpop.f32.mrf.mxu0
    %v284 = vpop.f32.mrf.mxu0
    %v285 = vadd.f32 0.0, %v284
    %v286 = vpop.f32.mrf.mxu0
    %287 = vmatprep.mubr.bf16.mxu0 0
    %288 = vmatmul.mubr.bf16.gmra.mxu0 %v156
    %v289 = vpop.f32.mrf.mxu0
    %v290 = vadd.f32 0.0, %v289
    %v291 = vpop.f32.mrf.mxu0
    %v292 = vpop.f32.mrf.mxu0
    %v293 = vadd.f32 0.0, %v292
    %v294 = vpop.f32.mrf.mxu0
    %295 = vmatprep.mubr.bf16.mxu0 0
    %296 = vmatmul.mubr.bf16.gmra.mxu0 %v157
    %v297 = vpop.f32.mrf.mxu0
    %v298 = vadd.f32 0.0, %v297
    %v299 = vpop.f32.mrf.mxu0
    %v300 = vpop.f32.mrf.mxu0
    %v301 = vadd.f32 0.0, %v300
    %v302 = vpop.f32.mrf.mxu0
    %303 = vmatprep.mubr.bf16.mxu0 0
    %304 = vmatmul.mubr.bf16.gmra.mxu0 %v158
    %v305 = vpop.f32.mrf.mxu0
    %v306 = vadd.f32 0.0, %v305
    %v307 = vpop.f32.mrf.mxu0
    %v308 = vpop.f32.mrf.mxu0
    %v309 = vadd.f32 0.0, %v308
    %v310 = vpop.f32.mrf.mxu0
    %311 = vdwg.mxu0
    %v312 = vadd.f32 %v71, %v250
    %v313 = vadd.f32 %v72, %v253
    %v314 = vadd.f32 %v73, %v258
    %v315 = vadd.f32 %v74, %v261
    %v316 = vadd.f32 %v75, %v266
    %v317 = vadd.f32 %v76, %v269
    %v318 = vadd.f32 %v77, %v274
    %v319 = vadd.f32 %v78, %v277
    %v320 = vadd.f32 %v79, %v282
    %v321 = vadd.f32 %v80, %v285
    %v322 = vadd.f32 %v81, %v290
    %v323 = vadd.f32 %v82, %v293
    %v324 = vadd.f32 %v83, %v298
    %v325 = vadd.f32 %v84, %v301
    %v326 = vadd.f32 %v85, %v306
    %v327 = vadd.f32 %v86, %v309
    %328 = vst [vmem:[#allocation2] sm:$0xff] %v312
    %329 = vst [vmem:[#allocation2 + $0x8] sm:$0xff] %v313
    %330 = vst [vmem:[#allocation2 + $0x10] sm:$0xff] %v314
    %331 = vst [vmem:[#allocation2 + $0x18] sm:$0xff] %v315
    %332 = vst [vmem:[#allocation2 + $0x20] sm:$0xff] %v316
    %333 = vst [vmem:[#allocation2 + $0x28] sm:$0xff] %v317
    %334 = vst [vmem:[#allocation2 + $0x30] sm:$0xff] %v318
    %335 = vst [vmem:[#allocation2 + $0x38] sm:$0xff] %v319
    %336 = vst [vmem:[#allocation2 + $0x40] sm:$0xff] %v320
    %337 = vst [vmem:[#allocation2 + $0x48] sm:$0xff] %v321
    %338 = vst [vmem:[#allocation2 + $0x50] sm:$0xff] %v322
    %339 = vst [vmem:[#allocation2 + $0x58] sm:$0xff] %v323
    %340 = vst [vmem:[#allocation2 + $0x60] sm:$0xff] %v324
    %341 = vst [vmem:[#allocation2 + $0x68] sm:$0xff] %v325
    %342 = vst [vmem:[#allocation2 + $0x70] sm:$0xff] %v326
    %343 = vst [vmem:[#allocation2 + $0x78] sm:$0xff] %v327
    // Predicated region
    $region26: #{tpu_custom_call.1} parent=1 // pred_check
      %p344 = pneg %p44
    $region27: #{tpu_custom_call.1} parent=1 // pred_check_branch
      %346 = sbr.rel (%p344) target = $region29
    $region28: #{tpu_custom_call.1} parent=1 // pred_region
      %v347 = vld [vmem:[#allocation2] sm:$0xff]
      %v348 = vld [vmem:[#allocation2 + $0x8] sm:$0xff]
      %v349 = vld [vmem:[#allocation2 + $0x10] sm:$0xff]
      %v350 = vld [vmem:[#allocation2 + $0x18] sm:$0xff]
      %v351 = vld [vmem:[#allocation2 + $0x20] sm:$0xff]
      %v352 = vld [vmem:[#allocation2 + $0x28] sm:$0xff]
      %v353 = vld [vmem:[#allocation2 + $0x30] sm:$0xff]
      %v354 = vld [vmem:[#allocation2 + $0x38] sm:$0xff]
      %v355 = vld [vmem:[#allocation2 + $0x40] sm:$0xff]
      %v356 = vld [vmem:[#allocation2 + $0x48] sm:$0xff]
      %v357 = vld [vmem:[#allocation2 + $0x50] sm:$0xff]
      %v358 = vld [vmem:[#allocation2 + $0x58] sm:$0xff]
      %v359 = vld [vmem:[#allocation2 + $0x60] sm:$0xff]
      %v360 = vld [vmem:[#allocation2 + $0x68] sm:$0xff]
      %v361 = vld [vmem:[#allocation2 + $0x70] sm:$0xff]
      %v362 = vld [vmem:[#allocation2 + $0x78] sm:$0xff]
      %v363 = vmax.f32 %v347, 0.0
      %v364 = vmax.f32 %v348, 0.0
      %v365 = vmax.f32 %v349, 0.0
      %v366 = vmax.f32 %v350, 0.0
      %v367 = vmax.f32 %v351, 0.0
      %v368 = vmax.f32 %v352, 0.0
      %v369 = vmax.f32 %v353, 0.0
      %v370 = vmax.f32 %v354, 0.0
      %v371 = vmax.f32 %v355, 0.0
      %v372 = vmax.f32 %v356, 0.0
      %v373 = vmax.f32 %v357, 0.0
      %v374 = vmax.f32 %v358, 0.0
      %v375 = vmax.f32 %v359, 0.0
      %v376 = vmax.f32 %v360, 0.0
      %v377 = vmax.f32 %v361, 0.0
      %v378 = vmax.f32 %v362, 0.0
      %379 = vst [vmem:[#allocation8] sm:$0xff] %v363
      %380 = vst [vmem:[#allocation8 + $0x8] sm:$0xff] %v364
      %381 = vst [vmem:[#allocation8 + $0x10] sm:$0xff] %v365
      %382 = vst [vmem:[#allocation8 + $0x18] sm:$0xff] %v366
      %383 = vst [vmem:[#allocation8 + $0x20] sm:$0xff] %v367
      %384 = vst [vmem:[#allocation8 + $0x28] sm:$0xff] %v368
      %385 = vst [vmem:[#allocation8 + $0x30] sm:$0xff] %v369
      %386 = vst [vmem:[#allocation8 + $0x38] sm:$0xff] %v370
      %387 = vst [vmem:[#allocation8 + $0x40] sm:$0xff] %v371
      %388 = vst [vmem:[#allocation8 + $0x48] sm:$0xff] %v372
      %389 = vst [vmem:[#allocation8 + $0x50] sm:$0xff] %v373
      %390 = vst [vmem:[#allocation8 + $0x58] sm:$0xff] %v374
      %391 = vst [vmem:[#allocation8 + $0x60] sm:$0xff] %v375
      %392 = vst [vmem:[#allocation8 + $0x68] sm:$0xff] %v376
      %393 = vst [vmem:[#allocation8 + $0x70] sm:$0xff] %v377
      %394 = vst [vmem:[#allocation8 + $0x78] sm:$0xff] %v378
    $region29: #{tpu_custom_call.1} parent=1 // pred_fallthru
      _
    // Predicated region
    $region30: #{tpu_custom_call.1} parent=1 // pred_check
      _
    $region31: #{tpu_custom_call.1} parent=1 // pred_check_branch
      %396 = sbr.rel (0) target = $region33
    $region32: #{tpu_custom_call.1} parent=1 // pred_region
      %s398 = ssub.s32 2048, 2048
      %399 = vsyncadd [#allocation5], %s398
      %s400 = sshll.u32 [#allocation8], 4
      %s401 = int_to_ptr.vmem [resolvable:$true] %s400
      %406 = dma.vmem_to_hbm [thread:$0]  %s401, 2048, %s3, [#allocation5], 128, 128, 8
    $region33: #{tpu_custom_call.1} parent=1 // pred_fallthru
      _
    // Predicated region
    $region34: #{tpu_custom_call.1} parent=1 // pred_check
      _
    $region35: #{tpu_custom_call.1} parent=1 // pred_check_branch
      %408 = sbr.rel (0) target = $region37
    $region36: #{tpu_custom_call.1} parent=1 // pred_region
      %409 = dma.done [#allocation5], 2048
    $region37: #{tpu_custom_call.1} parent=1 // pred_fallthru
      _
    %410 = vsyncpa [#allocation4], 1
    %411 = vsyncpa [#allocation7], 1
    %412 = vsyncpa [#allocation5], 1

</llo_original>
